<compile_context>
chip_gen: v7x
topology: tpu7x:2x2x1
jax: 0.10.0
libtpu: 0.0.40
codegen_flags: <defaults>
</compile_context>

<pallas_src>
import jax
import jax.numpy as jnp
from jax.experimental import pallas as pl
from jax.experimental.pallas import tpu as pltpu

_LANES = 128
_SUBLANES = 8


def _default_num_cores():
    """2 on dual-TensorCore chips (v7x), 1 on single-TC chips (v5e/v6e)."""
    try:
        kind = jax.devices()[0].device_kind.lower()
    except Exception:
        return 1
    # v7x (two TensorCores per chip).  v4/v5p megacore is out of scope here.
    if "7" in kind:
        return 2
    return 1


def _make_focal_kernel(rt, blocks_per_core, rows_valid):
    def kernel(o_ref, t_ref, acc_ref):
        c = pl.program_id(0)
        i = pl.program_id(1)

        @pl.when(i == 0)
        def _init():
            acc_ref[...] = jnp.zeros_like(acc_ref)

        o = o_ref[...].astype(jnp.float32)
        t = t_ref[...].astype(jnp.float32)

        # Rows past the real input (out-of-bounds / clamped blocks) are masked
        # out; they must contribute exactly zero to every accumulator.
        base_row = (c * blocks_per_core + i) * rt
        row_ids = jax.lax.broadcasted_iota(jnp.int32, (rt, _LANES), 0)
        valid = (base_row + row_ids) < rows_valid

        is_pos = t == 1.0
        # Both pos (t == 1) and neg (t < 1) contribute; t > 1 contributes
        # nothing (matches the reference's pos/neg index definitions).
        contrib = jnp.logical_and(valid, t <= 1.0)
        pos_sel = jnp.logical_and(valid, is_pos)

        omo = 1.0 - o
        # Single log per element: select its argument by the exclusive masks.
        prob = jnp.where(is_pos, o, omo)
        logp = jnp.log(prob)                      # EUP slot

        # weight = (1-o)^2            for pos
        #        = o^2 * (1-t)^4      for neg
        base = jnp.where(is_pos, omo, o)
        omt = 1.0 - t
        omt2 = omt * omt
        omt4 = omt2 * omt2
        weight = (base * base) * jnp.where(is_pos, 1.0, omt4)
        term = logp * weight

        zeros = jnp.zeros_like(term)
        ones = jnp.ones_like(term)
        tot_term = jnp.where(contrib, term, zeros)   # pos_loss + neg_loss terms
        pos_term = jnp.where(pos_sel, term, zeros)   # pos_loss terms only
        npos_term = jnp.where(pos_sel, ones, zeros)  # counts num_pos

        # Fold the tile down to one (8, 128) vreg per quantity: summing over
        # the leading axis of (rt//8, 8, 128) is plain vreg adds (no XLU).
        shp = (rt // _SUBLANES, _SUBLANES, _LANES)
        acc_ref[0, 0:_SUBLANES, :] += jnp.sum(pos_term.reshape(shp), axis=0)
        acc_ref[0, _SUBLANES:2 * _SUBLANES, :] += jnp.sum(tot_term.reshape(shp), axis=0)
        acc_ref[0, 2 * _SUBLANES:3 * _SUBLANES, :] += jnp.sum(npos_term.reshape(shp), axis=0)

    return kernel


def focal_loss(outputs, targets, *, row_tile=4096, num_cores=None):
    """outputs, targets: (B, C, H, W) arrays; outputs in (0, 1)."""
    assert outputs.shape == targets.shape
    assert row_tile % 16 == 0
    if num_cores is None:
        num_cores = _default_num_cores()

    total = outputs.size
    o_flat = outputs.reshape(-1)
    t_flat = targets.reshape(-1)

    # Only pad the flat tail up to one full 128-lane row (rare path; zeros
    # contribute exactly zero to the loss).  No tile-multiple padding: ragged
    # row blocks are masked in-kernel, so there is no extra HBM pass.
    rem = total % _LANES
    if rem:
        pad = _LANES - rem
        o_flat = jnp.concatenate([o_flat, jnp.zeros((pad,), o_flat.dtype)])
        t_flat = jnp.concatenate([t_flat, jnp.zeros((pad,), t_flat.dtype)])
    rows = (total + _LANES - 1) // _LANES
    o2 = o_flat.reshape(rows, _LANES)
    t2 = t_flat.reshape(rows, _LANES)

    # Row tile: big (4096 rows = 2 MiB f32 per input per step -> 8 MiB total
    # double-buffered, within every generation's scoped-VMEM default), clamped
    # for small inputs.  Multiple of 16 so bf16 inputs pack cleanly too.
    per_core_rows = -(-rows // num_cores)
    rt = min(row_tile, -(-per_core_rows // 16) * 16)
    rt = max(rt, 16)
    blocks_per_core = -(-rows // (num_cores * rt))

    grid = (num_cores, blocks_per_core)
    in_map = lambda c, i: (c * blocks_per_core + i, 0)
    out_map = lambda c, i: (c, 0, 0)

    if num_cores > 1:
        dim_sem = (pltpu.CORE_PARALLEL, pltpu.ARBITRARY)
    else:
        dim_sem = (pltpu.ARBITRARY, pltpu.ARBITRARY)

    kernel = _make_focal_kernel(rt, blocks_per_core, rows)

    itemsize = jnp.dtype(outputs.dtype).itemsize
    acc = pl.pallas_call(
        kernel,
        out_shape=jax.ShapeDtypeStruct((num_cores, 3 * _SUBLANES, _LANES), jnp.float32),
        grid_spec=pltpu.PrefetchScalarGridSpec(
            num_scalar_prefetch=0,
            grid=grid,
            in_specs=[
                pl.BlockSpec((rt, _LANES), in_map),
                pl.BlockSpec((rt, _LANES), in_map),
            ],
            out_specs=pl.BlockSpec((1, 3 * _SUBLANES, _LANES), out_map),
        ),
        compiler_params=pltpu.CompilerParams(dimension_semantics=dim_sem),
        cost_estimate=pl.CostEstimate(
            flops=20 * total,
            transcendentals=total,
            bytes_accessed=2 * total * itemsize,
        ),
    )(o2, t2)

    pos_sum = jnp.sum(acc[:, 0:_SUBLANES, :])
    tot_sum = jnp.sum(acc[:, _SUBLANES:2 * _SUBLANES, :])   # pos + neg
    num_pos = jnp.sum(acc[:, 2 * _SUBLANES:, :])

    neg_sum = tot_sum - pos_sum
    # loss = -neg_loss                       if num_pos == 0
    #        -(pos_loss + neg_loss)/num_pos  otherwise
    safe_den = jnp.maximum(num_pos, 1.0)
    return jnp.where(num_pos == 0.0, -neg_sum, -tot_sum / safe_den)


def _focal_loss_ref(outputs, targets):
    """Pure-JAX reference, mirrors the PyTorch _neg_loss exactly."""
    o = outputs.astype(jnp.float32)
    t = targets.astype(jnp.float32)
    pos_inds = (t == 1.0).astype(jnp.float32)
    neg_inds = (t < 1.0).astype(jnp.float32)
    neg_weights = (1.0 - t) ** 4
    pos_loss = jnp.sum(jnp.log(o) * (1.0 - o) ** 2 * pos_inds)
    neg_loss = jnp.sum(jnp.log(1.0 - o) * o ** 2 * neg_weights * neg_inds)
    num_pos = jnp.sum(pos_inds)
    return jnp.where(
        num_pos == 0.0,
        -neg_loss,
        -(pos_loss + neg_loss) / jnp.maximum(num_pos, 1.0),
    )


if __name__ == "__main__":
    key = jax.random.PRNGKey(0)
    k1, k2 = jax.random.split(key)

    B, C, H, W = 2, 4, 16, 16  # B*C*H*W = 2048 = 16 rows of 128

    # outputs: predicted heatmap probabilities in (0, 1)
    outputs = jax.nn.sigmoid(jax.random.normal(k1, (B, C, H, W), jnp.float32))
    outputs = jnp.clip(outputs, 1e-4, 1.0 - 1e-4)

    # targets: gaussian-splat-like heatmap in [0, 1] with a few exact 1.0 peaks
    targets = jax.random.uniform(k2, (B, C, H, W), jnp.float32, 0.0, 0.95)
    targets = targets.at[0, 0, 3, 5].set(1.0)
    targets = targets.at[0, 2, 10, 12].set(1.0)
    targets = targets.at[1, 1, 7, 7].set(1.0)
    targets = targets.at[1, 3, 14, 2].set(1.0)

    loss = focal_loss(outputs, targets)
    loss = jax.block_until_ready(loss)

    ref = _focal_loss_ref(outputs, targets)
    assert jnp.allclose(loss, ref, rtol=1e-5, atol=1e-5), (loss, ref)

    print("KERNEL_OK")
</pallas_src>

<mosaic_0001>
module attributes {stable_mosaic.version = 11 : i64} {
  func.func @kernel(%arg0: i32, %arg1: i32, %arg2: memref<16x128xf32, #tpu.memory_space<vmem>>, %arg3: memref<16x128xf32, #tpu.memory_space<vmem>>, %arg4: memref<1x24x128xf32, #tpu.memory_space<vmem>>) attributes {dimension_semantics = [#tpu.dimension_semantics<arbitrary>, #tpu.dimension_semantics<arbitrary>], iteration_bounds = array<i64: 1, 1>, scalar_prefetch = 0 : i64, scratch_operands = 0 : i64, tpu.core_type = #tpu.core_type<tc>, window_params = [{transform_indices = @transform_0, window_bounds = array<i64: 16, 128>}, {transform_indices = @transform_1, window_bounds = array<i64: 16, 128>}, {transform_indices = @transform_2, window_bounds = array<i64: 1, 24, 128>}]} {
    %c0_i32 = arith.constant 0 : i32
    %0 = arith.cmpi eq, %arg1, %c0_i32 : i32
    %1 = arith.extui %0 : i1 to i32
    %c0_i32_0 = arith.constant 0 : i32
    %2 = arith.cmpi ne, %1, %c0_i32_0 : i32
    scf.if %2 {
      %cst_30 = arith.constant 0.000000e+00 : f32
      %62 = vector.broadcast %cst_30 : f32 to vector<1x24x128xf32>
      %c0_31 = arith.constant 0 : index
      %c0_32 = arith.constant 0 : index
      %c0_33 = arith.constant 0 : index
      %63 = vector.load %arg4[%c0_31, %c0_32, %c0_33] : memref<1x24x128xf32, #tpu.memory_space<vmem>>, vector<1x24x128xf32>
      tpu.vector_store %arg4[%c0_31, %c0_32, %c0_33], %62 {strides = array<i32>} : memref<1x24x128xf32, #tpu.memory_space<vmem>>, vector<1x24x128xf32>,
    } else {
    }
    %c0 = arith.constant 0 : index
    %c0_1 = arith.constant 0 : index
    %3 = vector.load %arg2[%c0, %c0_1] : memref<16x128xf32, #tpu.memory_space<vmem>>, vector<16x128xf32>
    %c0_2 = arith.constant 0 : index
    %c0_3 = arith.constant 0 : index
    %4 = vector.load %arg3[%c0_2, %c0_3] : memref<16x128xf32, #tpu.memory_space<vmem>>, vector<16x128xf32>
    %c1_i32 = arith.constant 1 : i32
    %5 = arith.muli %arg0, %c1_i32 : i32
    %6 = arith.addi %5, %arg1 : i32
    %c16_i32 = arith.constant 16 : i32
    %7 = arith.muli %6, %c16_i32 : i32
    %8 = tpu.iota {dimensions = array<i32: 0>} : vector<16x128xi32>
    %9 = vector.broadcast %7 : i32 to vector<16x128xi32>
    %10 = arith.addi %9, %8 : vector<16x128xi32>
    %c16_i32_4 = arith.constant 16 : i32
    %11 = vector.broadcast %c16_i32_4 : i32 to vector<16x128xi32>
    %12 = arith.cmpi slt, %10, %11 : vector<16x128xi32>
    %cst = arith.constant 1.000000e+00 : f32
    %13 = vector.broadcast %cst : f32 to vector<16x128xf32>
    %14 = arith.cmpf oeq, %4, %13 : vector<16x128xf32>
    %cst_5 = arith.constant 1.000000e+00 : f32
    %15 = vector.broadcast %cst_5 : f32 to vector<16x128xf32>
    %16 = arith.cmpf ole, %4, %15 : vector<16x128xf32>
    %17 = arith.andi %12, %16 : vector<16x128xi1>
    %18 = arith.andi %12, %14 : vector<16x128xi1>
    %cst_6 = arith.constant 1.000000e+00 : f32
    %19 = vector.broadcast %cst_6 : f32 to vector<16x128xf32>
    %20 = arith.subf %19, %3 : vector<16x128xf32>
    %21 = arith.select %14, %3, %20 : vector<16x128xi1>, vector<16x128xf32>
    %22 = math.log %21 : vector<16x128xf32>
    %23 = arith.select %14, %20, %3 : vector<16x128xi1>, vector<16x128xf32>
    %cst_7 = arith.constant 1.000000e+00 : f32
    %24 = vector.broadcast %cst_7 : f32 to vector<16x128xf32>
    %25 = arith.subf %24, %4 : vector<16x128xf32>
    %26 = arith.mulf %25, %25 : vector<16x128xf32>
    %27 = arith.mulf %26, %26 : vector<16x128xf32>
    %28 = arith.mulf %23, %23 : vector<16x128xf32>
    %cst_8 = arith.constant 1.000000e+00 : f32
    %29 = vector.broadcast %cst_8 : f32 to vector<16x128xf32>
    %30 = arith.select %14, %29, %27 : vector<16x128xi1>, vector<16x128xf32>
    %31 = arith.mulf %28, %30 : vector<16x128xf32>
    %32 = arith.mulf %22, %31 : vector<16x128xf32>
    %cst_9 = arith.constant 0.000000e+00 : f32
    %33 = vector.broadcast %cst_9 : f32 to vector<16x128xf32>
    %cst_10 = arith.constant 1.000000e+00 : f32
    %34 = vector.broadcast %cst_10 : f32 to vector<16x128xf32>
    %35 = arith.select %17, %32, %33 : vector<16x128xi1>, vector<16x128xf32>
    %36 = arith.select %18, %32, %33 : vector<16x128xi1>, vector<16x128xf32>
    %37 = arith.select %18, %34, %33 : vector<16x128xi1>, vector<16x128xf32>
    %c0_11 = arith.constant 0 : index
    %c0_12 = arith.constant 0 : index
    %c0_13 = arith.constant 0 : index
    %38 = vector.load %arg4[%c0_11, %c0_12, %c0_13] : memref<1x24x128xf32, #tpu.memory_space<vmem>>, vector<1x8x128xf32>
    %39 = vector.shape_cast %38 : vector<1x8x128xf32> to vector<8x128xf32>
    %40 = vector.shape_cast %36 : vector<16x128xf32> to vector<2x8x128xf32>
    %cst_14 = arith.constant dense<0.000000e+00> : vector<8x128xf32>
    %41 = vector.multi_reduction <add>, %40, %cst_14 [0] : vector<2x8x128xf32> to vector<8x128xf32>
    %42 = arith.addf %39, %41 : vector<8x128xf32>
    %c0_15 = arith.constant 0 : index
    %c0_16 = arith.constant 0 : index
    %c0_17 = arith.constant 0 : index
    %43 = vector.load %arg4[%c0_15, %c0_16, %c0_17] : memref<1x24x128xf32, #tpu.memory_space<vmem>>, vector<1x8x128xf32>
    %44 = vector.shape_cast %43 : vector<1x8x128xf32> to vector<8x128xf32>
    %45 = vector.shape_cast %42 : vector<8x128xf32> to vector<1x8x128xf32>
    tpu.vector_store %arg4[%c0_15, %c0_16, %c0_17], %45 {strides = array<i32>} : memref<1x24x128xf32, #tpu.memory_space<vmem>>, vector<1x8x128xf32>,
    %c0_18 = arith.constant 0 : index
    %c8 = arith.constant 8 : index
    %c0_19 = arith.constant 0 : index
    %46 = vector.load %arg4[%c0_18, %c8, %c0_19] : memref<1x24x128xf32, #tpu.memory_space<vmem>>, vector<1x8x128xf32>
    %47 = vector.shape_cast %46 : vector<1x8x128xf32> to vector<8x128xf32>
    %48 = vector.shape_cast %35 : vector<16x128xf32> to vector<2x8x128xf32>
    %cst_20 = arith.constant dense<0.000000e+00> : vector<8x128xf32>
    %49 = vector.multi_reduction <add>, %48, %cst_20 [0] : vector<2x8x128xf32> to vector<8x128xf32>
    %50 = arith.addf %47, %49 : vector<8x128xf32>
    %c0_21 = arith.constant 0 : index
    %c8_22 = arith.constant 8 : index
    %c0_23 = arith.constant 0 : index
    %51 = vector.load %arg4[%c0_21, %c8_22, %c0_23] : memref<1x24x128xf32, #tpu.memory_space<vmem>>, vector<1x8x128xf32>
    %52 = vector.shape_cast %51 : vector<1x8x128xf32> to vector<8x128xf32>
    %53 = vector.shape_cast %50 : vector<8x128xf32> to vector<1x8x128xf32>
    tpu.vector_store %arg4[%c0_21, %c8_22, %c0_23], %53 {strides = array<i32>} : memref<1x24x128xf32, #tpu.memory_space<vmem>>, vector<1x8x128xf32>,
    %c0_24 = arith.constant 0 : index
    %c16 = arith.constant 16 : index
    %c0_25 = arith.constant 0 : index
    %54 = vector.load %arg4[%c0_24, %c16, %c0_25] : memref<1x24x128xf32, #tpu.memory_space<vmem>>, vector<1x8x128xf32>
    %55 = vector.shape_cast %54 : vector<1x8x128xf32> to vector<8x128xf32>
    %56 = vector.shape_cast %37 : vector<16x128xf32> to vector<2x8x128xf32>
    %cst_26 = arith.constant dense<0.000000e+00> : vector<8x128xf32>
    %57 = vector.multi_reduction <add>, %56, %cst_26 [0] : vector<2x8x128xf32> to vector<8x128xf32>
    %58 = arith.addf %55, %57 : vector<8x128xf32>
    %c0_27 = arith.constant 0 : index
    %c16_28 = arith.constant 16 : index
    %c0_29 = arith.constant 0 : index
    %59 = vector.load %arg4[%c0_27, %c16_28, %c0_29] : memref<1x24x128xf32, #tpu.memory_space<vmem>>, vector<1x8x128xf32>
    %60 = vector.shape_cast %59 : vector<1x8x128xf32> to vector<8x128xf32>
    %61 = vector.shape_cast %58 : vector<8x128xf32> to vector<1x8x128xf32>
    tpu.vector_store %arg4[%c0_27, %c16_28, %c0_29], %61 {strides = array<i32>} : memref<1x24x128xf32, #tpu.memory_space<vmem>>, vector<1x8x128xf32>,
    return
  }
  func.func @transform_0(%arg0: i32, %arg1: i32) -> (i32, i32) {
    %c1_i32 = arith.constant 1 : i32
    %0 = arith.muli %arg0, %c1_i32 : i32
    %1 = arith.addi %0, %arg1 : i32
    %c0_i32 = arith.constant 0 : i32
    %c0_i32_0 = arith.constant 0 : i32
    return %1, %c0_i32 : i32, i32
  }
  func.func @transform_1(%arg0: i32, %arg1: i32) -> (i32, i32) {
    %c1_i32 = arith.constant 1 : i32
    %0 = arith.muli %arg0, %c1_i32 : i32
    %1 = arith.addi %0, %arg1 : i32
    %c0_i32 = arith.constant 0 : i32
    %c0_i32_0 = arith.constant 0 : i32
    return %1, %c0_i32 : i32, i32
  }
  func.func @transform_2(%arg0: i32, %arg1: i32) -> (i32, i32, i32) {
    %c0_i32 = arith.constant 0 : i32
    %c0_i32_0 = arith.constant 0 : i32
    %c0_i32_1 = arith.constant 0 : i32
    return %arg0, %c0_i32, %c0_i32_0 : i32, i32, i32
  }
}

</mosaic_0001>

<llo_original>
// kernel: tpu_custom_call.1
$region0: #{tpu_custom_call.1}
  #allocation0 [shape = 'u32[]', space=smem, size = 0x4, offset = 0x4, fixed_abs, tag = 'smem constant byte address 0x4 - core index']
  #allocation1 [shape = 'u32[144,128]{1,0:T(1,128)}', space=vmem, size = 0x12000, scoped, tag = 'internal scratch']
  %s0 = inlined_call_operand.hbm [shape: f32[16,128], index: 0, kind: input, shape index: {}]
  %s1 = inlined_call_operand.hbm [shape: f32[16,128], index: 1, kind: input, shape index: {}]
  %s2 = inlined_call_operand.hbm [shape: f32[1,24,128], index: 2, kind: output, shape index: {}]
  %s3 = sld [smem:[#allocation0]]
  $region30: #{tpu_custom_call.1} parent=0
    _
  %s5 = ssub.s32 1, %s3
  %s6 = scalar_select 0, %s5, %s3
  $region1: #{tpu_custom_call.1} parent=0
    #allocation2 [shape = 'u8[8192]{0}', space=vmem, size = 0x2000, scoped, tag = 'input window, operand 0, single buffered']
    #allocation3 [shape = 's32[1]{0}', space=sflag, size = 0x4, scoped, tag = 'scoped memory for tpu_custom_call.1']
    #allocation4 [shape = 's32[1]{0}', space=sflag, size = 0x4, scoped, tag = 'scoped memory for tpu_custom_call.1']
    #allocation5 [shape = 'u8[8192]{0}', space=vmem, size = 0x2000, scoped, tag = 'input window, operand 1, single buffered']
    #allocation6 [shape = 's32[1]{0}', space=sflag, size = 0x4, scoped, tag = 'scoped memory for tpu_custom_call.1']
    #allocation7 [shape = 'u8[12288]{0}', space=vmem, size = 0x3000, scoped, tag = 'output window, operand 0, single buffered']
    %7 = vsyncpa [#allocation3], 0
    %8 = vsyncpa [#allocation6], 0
    %9 = vsyncpa [#allocation4], 0
    // Predicated region
    $region2: #{tpu_custom_call.1} parent=1 // pred_check
      _
    $region3: #{tpu_custom_call.1} parent=1 // pred_check_branch
      %11 = sbr.rel (0) target = $region5
    $region4: #{tpu_custom_call.1} parent=1 // pred_region
      %s12 = sadd.s32 0, 0
      %s13 = smul.u32 2, %s12
      %s15 = ssub.s32 256, 256
      %16 = vsyncadd [#allocation3], %s15
      %s17 = smul.addr %s13, 128
      %s18 = scalar_lea.hbm %s0, %s17
      %s19 = sshll.u32 [#allocation2], 4
      %s20 = int_to_ptr.vmem [resolvable:$true] %s19
      %25 = dma.hbm_to_vmem [thread:$0]  %s18, 256, %s20, [#allocation3], 128, 128, 8
    $region5: #{tpu_custom_call.1} parent=1 // pred_fallthru
      _
    // Predicated region
    $region6: #{tpu_custom_call.1} parent=1 // pred_check
      _
    $region7: #{tpu_custom_call.1} parent=1 // pred_check_branch
      %27 = sbr.rel (0) target = $region9
    $region8: #{tpu_custom_call.1} parent=1 // pred_region
      %s28 = sadd.s32 0, 0
      %s29 = smul.u32 2, %s28
      %s31 = ssub.s32 256, 256
      %32 = vsyncadd [#allocation6], %s31
      %s33 = smul.addr %s29, 128
      %s34 = scalar_lea.hbm %s1, %s33
      %s35 = sshll.u32 [#allocation5], 4
      %s36 = int_to_ptr.vmem [resolvable:$true] %s35
      %41 = dma.hbm_to_vmem [thread:$0]  %s34, 256, %s36, [#allocation6], 128, 128, 8
    $region9: #{tpu_custom_call.1} parent=1 // pred_fallthru
      _
    // Predicated region
    $region10: #{tpu_custom_call.1} parent=1 // pred_check
      _
    $region11: #{tpu_custom_call.1} parent=1 // pred_check_branch
      %43 = sbr.rel (0) target = $region13
    $region12: #{tpu_custom_call.1} parent=1 // pred_region
      %44 = dma.done [#allocation3], 256
    $region13: #{tpu_custom_call.1} parent=1 // pred_fallthru
      _
    // Predicated region
    $region14: #{tpu_custom_call.1} parent=1 // pred_check
      _
    $region15: #{tpu_custom_call.1} parent=1 // pred_check_branch
      %46 = sbr.rel (0) target = $region17
    $region16: #{tpu_custom_call.1} parent=1 // pred_region
      %47 = dma.done [#allocation6], 256
    $region17: #{tpu_custom_call.1} parent=1 // pred_fallthru
      _
    %s48 = sadd.s32 0, 0
    %s49 = smul.u32 2, %s48
    %s50 = sadd.s32 0, 0
    %s51 = smul.u32 2, %s50
    %p52 = scmp.eq.s32.totalorder 0, 0
    // Predicated region
    $region18: #{tpu_custom_call.1} parent=1 // pred_check
      %p53 = pneg %p52
    $region19: #{tpu_custom_call.1} parent=1 // pred_check_branch
      %55 = sbr.rel (%p53) target = $region21
    $region20: #{tpu_custom_call.1} parent=1 // pred_region
      %56 = vst [vmem:[#allocation7] sm:$0xff] 0.0
      %57 = vst [vmem:[#allocation7 + $0x8] sm:$0xff] 0.0
      %58 = vst [vmem:[#allocation7 + $0x10] sm:$0xff] 0.0
    $region21: #{tpu_custom_call.1} parent=1 // pred_fallthru
      _
    %v59 = vld [vmem:[#allocation2] sm:$0xff]
    %v60 = vld [vmem:[#allocation2 + $0x8] sm:$0xff]
    %v61 = vld [vmem:[#allocation5] sm:$0xff]
    %v62 = vld [vmem:[#allocation5 + $0x8] sm:$0xff]
    %s63 = sadd.s32 0, 0
    %s64 = smul.u32 %s63, 16
    %v65 = vlaneseq
    %v66 = vshrl.u32 %v65, 7
    %v67 = vadd.s32 %v66, 8
    %v68 = vstv %s64
    %v69 = vadd.s32 %v68, %v66
    %v70 = vadd.s32 %v68, %v67
    %vm71 = vcmp.lt.s32.totalorder %v69, 16
    %vm72 = vcmp.lt.s32.totalorder %v70, 16
    %vm73 = vcmp.eq.f32.partialorder %v61, 1.0
    %vm74 = vcmp.eq.f32.partialorder %v62, 1.0
    %vm75 = vcmp.le.f32.partialorder %v61, 1.0
    %vm76 = vcmp.le.f32.partialorder %v62, 1.0
    %vm77 = vmand %vm71, %vm75
    %vm78 = vmand %vm72, %vm76
    %vm79 = vmand %vm71, %vm73
    %vm80 = vmand %vm72, %vm74
    %v81 = vsub.f32 1.0, %v59
    %v82 = vsub.f32 1.0, %v60
    %v83 = vsel %vm73, %v59, %v81
    %v84 = vsel %vm74, %v60, %v82
    %v85 = vlog2.pop %v83
    %v86 = vmul.f32 %v85, 0.6931472
    %v87 = vlog2.pop %v84
    %v88 = vmul.f32 %v87, 0.6931472
    %v89 = vsel %vm73, %v81, %v59
    %v90 = vsel %vm74, %v82, %v60
    %v91 = vsub.f32 1.0, %v61
    %v92 = vsub.f32 1.0, %v62
    %v93 = vmul.f32 %v91, %v91
    %v94 = vmul.f32 %v92, %v92
    %v95 = vmul.f32 %v93, %v93
    %v96 = vmul.f32 %v94, %v94
    %v97 = vmul.f32 %v89, %v89
    %v98 = vmul.f32 %v90, %v90
    %v99 = vsel %vm73, 1.0, %v95
    %v100 = vsel %vm74, 1.0, %v96
    %v101 = vmul.f32 %v97, %v99
    %v102 = vmul.f32 %v98, %v100
    %v103 = vmul.f32 %v86, %v101
    %v104 = vmul.f32 %v88, %v102
    %v105 = vsel %vm77, %v103, 0.0
    %v106 = vsel %vm78, %v104, 0.0
    %v107 = vsel %vm79, %v103, 0.0
    %v108 = vsel %vm80, %v104, 0.0
    %v109 = vsel %vm79, 1.0, 0.0
    %v110 = vsel %vm80, 1.0, 0.0
    %v111 = vld [vmem:[#allocation7] sm:$0xff]
    %v112 = vadd.f32 %v107, %v108
    %v113 = vadd.f32 %v111, %v112
    %114 = vst [vmem:[#allocation7] sm:$0xff] %v113
    %v115 = vld [vmem:[#allocation7 + $0x8] sm:$0xff]
    %v116 = vadd.f32 %v105, %v106
    %v117 = vadd.f32 %v115, %v116
    %118 = vst [vmem:[#allocation7 + $0x8] sm:$0xff] %v117
    %v119 = vld [vmem:[#allocation7 + $0x10] sm:$0xff]
    %v120 = vadd.f32 %v109, %v110
    %v121 = vadd.f32 %v119, %v120
    %122 = vst [vmem:[#allocation7 + $0x10] sm:$0xff] %v121
    // Predicated region
    $region22: #{tpu_custom_call.1} parent=1 // pred_check
      _
    $region23: #{tpu_custom_call.1} parent=1 // pred_check_branch
      %124 = sbr.rel (0) target = $region25
    $region24: #{tpu_custom_call.1} parent=1 // pred_region
      %s126 = ssub.s32 384, 384
      %127 = vsyncadd [#allocation4], %s126
      %s128 = sshll.u32 [#allocation7], 4
      %s129 = int_to_ptr.vmem [resolvable:$true] %s128
      %134 = dma.vmem_to_hbm [thread:$0]  %s129, 384, %s2, [#allocation4], 128, 128, 8
    $region25: #{tpu_custom_call.1} parent=1 // pred_fallthru
      _
    // Predicated region
    $region26: #{tpu_custom_call.1} parent=1 // pred_check
      _
    $region27: #{tpu_custom_call.1} parent=1 // pred_check_branch
      %136 = sbr.rel (0) target = $region29
    $region28: #{tpu_custom_call.1} parent=1 // pred_region
      %137 = dma.done [#allocation4], 384
    $region29: #{tpu_custom_call.1} parent=1 // pred_fallthru
      _
    %138 = vsyncpa [#allocation3], 1
    %139 = vsyncpa [#allocation6], 1
    %140 = vsyncpa [#allocation4], 1

</llo_original>
